<compile_context>
chip_gen: v6e
topology: v6e:2x2x1
jax: 0.10.0
libtpu: 0.0.40
codegen_flags: <defaults>
</compile_context>

<pallas_src>
import numpy as np
import jax
import jax.numpy as jnp
from jax.experimental import pallas as pl
from jax.experimental.pallas import tpu as pltpu


# =============================================================================
# Lane-dense 2-D views for the elementwise paths (brightness / gaussian)
# =============================================================================
_LANE_WIDTHS = (1024, 512, 256, 128)      # multiples of 128 -> unmasked stores


def _lane_dense_view(x):
    """Return (x2d, padded): a (rows, cols) lane-dense view of x.

    When x.size divides one of the candidate widths the view is a free reshape
    (no pad / slice HBM passes); otherwise fall back to padding to 1024 wide.
    """
    total = x.size
    for cols in _LANE_WIDTHS:
        if total % cols == 0:
            return x.reshape(total // cols, cols), False
    cols = _LANE_WIDTHS[0]
    rows = -(-total // cols)
    xf = jnp.pad(x.reshape(-1), (0, rows * cols - total))
    return xf.reshape(rows, cols), True


def _from_lane_dense(y2d, shape, total, padded):
    if padded:
        return y2d.reshape(-1)[:total].reshape(shape)
    return y2d.reshape(shape)


def _pick_block_rows(rows, max_rows):
    """Largest block within budget, but keep >=2 grid blocks on medium inputs so
    both TensorCores (v7x megacore) get work along the 'parallel' axis."""
    if rows <= 8:
        return rows                      # tiny input: single full-dim block
    bm = min(max_rows, rows)
    if bm >= rows:                       # would be one block -> split in two
        bm = max(8, (((rows + 1) // 2 + 7) // 8) * 8)
        bm = min(bm, rows)
    return bm


def _elementwise_call(kernel, x2d, smem_args, max_rows):
    rows, cols = x2d.shape
    bm = _pick_block_rows(rows, max_rows)
    grid = (pl.cdiv(rows, bm),)
    smem_specs = [pl.BlockSpec(memory_space=pltpu.MemorySpace.SMEM)
                  for _ in smem_args]
    block_bytes = bm * cols * 4
    vmem_limit = int(min(4 * block_bytes + (8 << 20), 56 << 20))
    return pl.pallas_call(
        kernel,
        out_shape=jax.ShapeDtypeStruct(x2d.shape, x2d.dtype),
        grid=grid,
        in_specs=smem_specs + [pl.BlockSpec((bm, cols), lambda i: (i, 0))],
        out_specs=pl.BlockSpec((bm, cols), lambda i: (i, 0)),
        compiler_params=pltpu.CompilerParams(
            dimension_semantics=("parallel",),
            vmem_limit_bytes=vmem_limit),
    )(*smem_args, x2d)


# =============================================================================
# Kernel 1: brightness  out = scale * x
# =============================================================================
def _brightness_kernel(scale_ref, x_ref, o_ref):
    x = x_ref[...].astype(jnp.float32)
    o_ref[...] = (x * scale_ref[0]).astype(o_ref.dtype)


@jax.jit
def _brightness_fwd(x, scale):
    total, shape = x.size, x.shape
    x2d, padded = _lane_dense_view(x)
    y2d = _elementwise_call(
        _brightness_kernel, x2d,
        [jnp.full((1,), scale, jnp.float32)],
        max_rows=1024)                   # pure streaming: big tiles pay off
    return _from_lane_dense(y2d, shape, total, padded)


# =============================================================================
# Kernel 2: gaussian  out = x + sigma * N(0,1)
# Noise generated in-kernel with a portable counter-hash PRNG (plain jnp int32
# ops, no TPU-only primitives) + Box-Muller using BOTH outputs.
# =============================================================================
def _u32_as_i32(v):
    return int(np.asarray(v, dtype=np.uint32).view(np.int32))


_MIX_M1 = _u32_as_i32(0x7FEB352D)
_MIX_M2 = _u32_as_i32(0x846CA68B)
_STREAM2 = _u32_as_i32(0x5BD1E995)
_SEED_MUL = _u32_as_i32(0x9E3779B1)
_INV_2_24 = float(1.0 / (1 << 24))
_TWO_PI = float(2.0 * np.pi)


def _lsr(x, s):
    # Logical right shift on int32 (arithmetic shift + mask) — portable.
    mask = jnp.int32((1 << (32 - s)) - 1)
    return (x >> s) & mask


def _mix32(x):
    # fmix32-style integer avalanche; int32 arithmetic wraps mod 2^32.
    x = x ^ _lsr(x, 16)
    x = x * jnp.int32(_MIX_M1)
    x = x ^ _lsr(x, 15)
    x = x * jnp.int32(_MIX_M2)
    x = x ^ _lsr(x, 16)
    return x


def _bits_to_uniform(bits):
    # top 24 bits -> f32 uniform in [0, 1)
    return _lsr(bits, 8).astype(jnp.float32) * jnp.float32(_INV_2_24)


def _gaussian_kernel(seed_ref, sigma_ref, x_ref, o_ref):
    bm, cols = x_ref.shape
    half = cols // 2
    # Unique per-element counters over the whole array (half-width: each pair
    # of uniforms yields two normal samples).
    row = jax.lax.broadcasted_iota(jnp.int32, (bm, half), 0)
    col = jax.lax.broadcasted_iota(jnp.int32, (bm, half), 1)
    grow = pl.program_id(0) * bm + row
    ctr = grow * jnp.int32(cols) + col + seed_ref[0] * jnp.int32(_SEED_MUL)
    b1 = _mix32(ctr)
    b2 = _mix32(ctr ^ jnp.int32(_STREAM2))
    u1 = jnp.float32(1.0) - _bits_to_uniform(b1)     # (0, 1]
    u2 = _bits_to_uniform(b2)                        # [0, 1)
    # Box-Muller using BOTH outputs: halves bits / log / sqrt volume.
    # Transcendentals run on the otherwise-idle EUP slot.
    r = jnp.sqrt(jnp.float32(-2.0) * jnp.log(u1))
    theta = jnp.float32(_TWO_PI) * u2
    z = jnp.concatenate([r * jnp.cos(theta), r * jnp.sin(theta)], axis=-1)
    x = x_ref[...].astype(jnp.float32)
    o_ref[...] = (x + sigma_ref[0] * z).astype(o_ref.dtype)


@jax.jit
def _gaussian_fwd(x, sigma, seed):
    total, shape = x.size, x.shape
    x2d, padded = _lane_dense_view(x)
    y2d = _elementwise_call(
        _gaussian_kernel, x2d,
        [jnp.full((1,), seed, jnp.int32), jnp.full((1,), sigma, jnp.float32)],
        max_rows=512)     # compute-bound: smaller tile costs nothing at roofline
    return _from_lane_dense(y2d, shape, total, padded)


# =============================================================================
# Kernel 3: depthwise separable 5-tap 'same' Gaussian blur, zero padding.
# Expressed as two banded-Toeplitz MXU matmuls: Y = B_H @ X @ B_W per (n, c).
# =============================================================================
_BLUR_K = 5
_PAD = _BLUR_K // 2


def _blur_kernel(bh_ref, bw_ref, x_ref, o_ref):
    x = x_ref[...].astype(jnp.float32)                                  # (H, W)
    h = jnp.dot(x, bw_ref[...], preferred_element_type=jnp.float32)     # H pass
    y = jnp.dot(bh_ref[...], h, preferred_element_type=jnp.float32)     # V pass
    o_ref[...] = y.astype(o_ref.dtype)


def _band_matrix(w, n):
    # Symmetric banded matrix: B[k, j] = w[|k - j| + 2] for |k - j| <= 2.
    b = jnp.eye(n, k=-_PAD, dtype=jnp.float32) * w[0]
    for t in range(1, _BLUR_K):
        b = b + jnp.eye(n, k=t - _PAD, dtype=jnp.float32) * w[t]
    return b


@jax.jit
def _blur_fwd(x, w1d):
    N, C, H, W = x.shape
    bh = _band_matrix(w1d, H)
    bw = _band_matrix(w1d, W)
    # Per-step live VMEM: 2x in + 2x out blocks, 2x each band matrix, temps.
    needed = (6 * H * W + 2 * H * H + 2 * W * W) * 4 + (4 << 20)
    vmem_limit = int(min(max(needed, 16 << 20), 56 << 20))
    # TODO(synk): for very large images (H*W*4 >~ 8 MiB) add an H-stripe grid
    # axis with a 2-row halo to stay inside v7x's 64 MiB VMEM.
    return pl.pallas_call(
        _blur_kernel,
        out_shape=jax.ShapeDtypeStruct(x.shape, x.dtype),
        grid=(N, C),
        in_specs=[
            pl.BlockSpec((H, H), lambda n, c: (0, 0)),
            pl.BlockSpec((W, W), lambda n, c: (0, 0)),
            pl.BlockSpec((None, None, H, W), lambda n, c: (n, c, 0, 0)),
        ],
        out_specs=pl.BlockSpec((None, None, H, W), lambda n, c: (n, c, 0, 0)),
        compiler_params=pltpu.CompilerParams(
            dimension_semantics=("parallel", "parallel"),
            vmem_limit_bytes=vmem_limit),
    )(bh, bw, x)


def _gaussian_taps(sigma_blur):
    # TODO(synk): fixed 5x5 separable kernel with zero 'same' padding; verify
    # window size / padding mode against the reference GaussianBlur noise layer
    # if it derives the window from sigma or uses reflect padding.
    ax = np.arange(_BLUR_K, dtype=np.float64) - _PAD
    g = np.exp(-(ax ** 2) / (2.0 * float(sigma_blur) ** 2))
    g = (g / g.sum()).astype(np.float32)
    return jnp.asarray(g)


# =============================================================================
# Noiser: picks a random noise layer per forward call and applies it.
# =============================================================================
class Noiser:
    def __init__(self, noises, a, sigma, sigma_blur, Q,
                 decoder=None, message_length=None, img_size=None, seed=0):
        noises = noises.split('+') if noises else ['identity']
        self.a = a
        self.sigma = sigma
        self.sigma_blur = sigma_blur
        self.Q = Q
        self.noise_types = []
        for noise in noises:
            if noise in ('identity', 'brightness', 'gaussian', 'blur', 'jpeg'):
                self.noise_types.append(noise)
            else:
                raise ValueError('Noise not recognized: \n{}'.format(noise))
        # deterministic layer selection / parameter sampling (mirrors np.random use)
        self._rng = np.random.RandomState(seed)

    def forward(self, encoded_images):
        noise = self._rng.choice(self.noise_types)
        if noise == 'identity':
            # Pure no-op: skip the kernel entirely (exact, zero HBM traffic).
            return encoded_images
        if noise == 'brightness':
            factor = float(self._rng.uniform(self.a[0], self.a[1]))
            return _brightness_fwd(encoded_images, jnp.float32(factor))
        if noise == 'gaussian':
            sig = float(self._rng.uniform(self.sigma[0], self.sigma[1]))
            seed = int(self._rng.randint(0, 2 ** 31 - 1))
            return _gaussian_fwd(encoded_images, jnp.float32(sig), jnp.int32(seed))
        if noise == 'blur':
            sb = float(self._rng.uniform(self.sigma_blur[0], self.sigma_blur[1]))
            return _blur_fwd(encoded_images, _gaussian_taps(sb))
        # TODO(synk): DiffJPEG (blockwise DCT + quantization + IDCT) has no clean
        # Pallas port here; not faked.
        raise NotImplementedError('jpeg (DiffJPEG) not implemented as a Pallas kernel')

    __call__ = forward


if __name__ == "__main__":
    key = jax.random.PRNGKey(0)
    x = jax.random.uniform(key, (2, 4, 16, 16), dtype=jnp.float32)

    common = dict(a=(0.5, 1.5), sigma=(0.0, 0.1), sigma_blur=(0.5, 2.0),
                  Q=(50, 90), decoder=None, message_length=30, img_size=16)

    # Exercise every implemented noise layer deterministically.
    for nz in ('identity', 'brightness', 'gaussian', 'blur'):
        noiser = Noiser(noises=nz, seed=0, **common)
        y = jax.block_until_ready(noiser(x))
        assert y.shape == x.shape and y.dtype == x.dtype

    # Random-choice path, as in the original module.
    noiser = Noiser(noises='identity+brightness+gaussian+blur', seed=0, **common)
    for _ in range(4):
        y = jax.block_until_ready(noiser(x))
        assert y.shape == x.shape and y.dtype == x.dtype

    print("KERNEL_OK")
</pallas_src>

<mosaic_0001>
module attributes {stable_mosaic.version = 11 : i64} {
  func.func @_brightness_kernel(%arg0: i32, %arg1: memref<1xf32, #tpu.memory_space<smem>>, %arg2: memref<2x1024xf32, #tpu.memory_space<vmem>>, %arg3: memref<2x1024xf32, #tpu.memory_space<vmem>>) attributes {dimension_semantics = [#tpu.dimension_semantics<parallel>], iteration_bounds = array<i64: 1>, scalar_prefetch = 0 : i64, scratch_operands = 0 : i64, tpu.core_type = #tpu.core_type<tc>, window_params = [{transform_indices = @transform_0, window_bounds = array<i64: 1>}, {transform_indices = @transform_1, window_bounds = array<i64: 2, 1024>}, {transform_indices = @transform_2, window_bounds = array<i64: 2, 1024>}]} {
    %c0 = arith.constant 0 : index
    %c0_0 = arith.constant 0 : index
    %0 = vector.load %arg2[%c0, %c0_0] : memref<2x1024xf32, #tpu.memory_space<vmem>>, vector<2x1024xf32>
    %c0_1 = arith.constant 0 : index
    %1 = memref.load %arg1[%c0_1] : memref<1xf32, #tpu.memory_space<smem>>
    %2 = vector.broadcast %1 : f32 to vector<2x1024xf32>
    %3 = arith.mulf %0, %2 : vector<2x1024xf32>
    %c0_2 = arith.constant 0 : index
    %c0_3 = arith.constant 0 : index
    %4 = vector.load %arg3[%c0_2, %c0_3] : memref<2x1024xf32, #tpu.memory_space<vmem>>, vector<2x1024xf32>
    tpu.vector_store %arg3[%c0_2, %c0_3], %3 {strides = array<i32>} : memref<2x1024xf32, #tpu.memory_space<vmem>>, vector<2x1024xf32>,
    return
  }
  func.func @transform_0(%arg0: i32) -> i32 {
    %c0_i32 = arith.constant 0 : i32
    %c0_i32_0 = arith.constant 0 : i32
    return %c0_i32 : i32
  }
  func.func @transform_1(%arg0: i32) -> (i32, i32) {
    %c0_i32 = arith.constant 0 : i32
    %c0_i32_0 = arith.constant 0 : i32
    return %arg0, %c0_i32 : i32, i32
  }
  func.func @transform_2(%arg0: i32) -> (i32, i32) {
    %c0_i32 = arith.constant 0 : i32
    %c0_i32_0 = arith.constant 0 : i32
    return %arg0, %c0_i32 : i32, i32
  }
}

</mosaic_0001>

<llo_original>
// kernel: _brightness_fwd.1
$region0: #{_brightness_fwd.1}
  #allocation0 [shape = 'u32[]', space=smem, size = 0x4, offset = 0x4, fixed_abs, tag = 'smem constant byte address 0x4 - core index']
  #allocation1 [shape = 'u32[144,128]{1,0:T(1,128)}', space=vmem, size = 0x12000, scoped, tag = 'internal scratch']
  #allocation2 [shape = 'f32[1]{0:T(128)S(6)}', space=smem, size = 0x200, scoped, tag = 'scoped memory for _brightness_fwd.1']
  %s0 = inlined_call_operand.<no memory space> [shape: f32[1], index: 0, kind: input, shape index: {}]
  %s1 = inlined_call_operand.vmem [shape: f32[2,1024], index: 1, kind: input, shape index: {}]
  %s2 = inlined_call_operand.vmem [shape: f32[2,1024], index: 2, kind: output, shape index: {}]
  %s3 = sld [smem:[#allocation0]]
  $region18: #{_brightness_fwd.1} parent=0
    _
  %s5 = ssub.s32 1, %s3
  %s6 = scalar_select 0, %s5, %s3
  %7 = sst [smem:[#allocation2]] %s0
  // Predicated region
  $region2: #{_brightness_fwd.1} parent=0 // pred_check
    _
  $region3: #{_brightness_fwd.1} parent=0 // pred_check_branch
    %9 = sbr.rel (0) target = $region5
  $region4: #{_brightness_fwd.1} parent=0 // pred_region
    _
  $region5: #{_brightness_fwd.1} parent=0 // pred_fallthru
    _
  // Predicated region
  $region6: #{_brightness_fwd.1} parent=0 // pred_check
    _
  $region7: #{_brightness_fwd.1} parent=0 // pred_check_branch
    %11 = sbr.rel (0) target = $region9
  $region8: #{_brightness_fwd.1} parent=0 // pred_region
    _
  $region9: #{_brightness_fwd.1} parent=0 // pred_fallthru
    _
  %v12 = vld [vmem:[%s1] sm:$0xff]
  %v13 = vld [vmem:[%s1 + $0x8] sm:$0xff]
  %s14 = sld [smem:[#allocation2]]
  %v15 = vstv %s14
  %v16 = vmul.f32 %v12, %v15
  %v17 = vmul.f32 %v13, %v15
  %18 = vst [vmem:[%s2] sm:$0xff] %v16
  %19 = vst [vmem:[%s2 + $0x8] sm:$0xff] %v17
  // Predicated region
  $region10: #{_brightness_fwd.1} parent=0 // pred_check
    _
  $region11: #{_brightness_fwd.1} parent=0 // pred_check_branch
    %21 = sbr.rel (0) target = $region13
  $region12: #{_brightness_fwd.1} parent=0 // pred_region
    _
  $region13: #{_brightness_fwd.1} parent=0 // pred_fallthru
    _
  // Predicated region
  $region14: #{_brightness_fwd.1} parent=0 // pred_check
    _
  $region15: #{_brightness_fwd.1} parent=0 // pred_check_branch
    %23 = sbr.rel (0) target = $region17
  $region16: #{_brightness_fwd.1} parent=0 // pred_region
    _
  $region17: #{_brightness_fwd.1} parent=0 // pred_fallthru
    _

</llo_original>
